<compile_context>
chip_gen: v5e
topology: v5e:2x2
jax: 0.10.0
libtpu: 0.0.40
codegen_flags: <defaults>
</compile_context>

<pallas_src>
import jax
import jax.numpy as jnp
from jax.experimental import pallas as pl
from jax.experimental.pallas import tpu as pltpu


def _round_up(n, m):
    return ((n + m - 1) // m) * m


def _latent_discriminator_kernel(x_ref, w1_ref, b1_ref, w2_ref, b2_ref, o_ref):
    # x_ref : (tm, pack*model_size)            f32 tile of row-packed encoder outputs
    # w1_ref: (pack*model_size, pack*hidden)   bf16 block-diagonal W1 (resident)
    # b1_ref: (1, pack*hidden)                 f32 tiled bias (resident)
    # w2_ref: (pack*hidden, pack*output)       bf16 block-diagonal W2 (resident)
    # b2_ref: (1, pack*output)                 f32 tiled bias (resident)
    # o_ref : (tm, pack*output)                output dtype
    #
    # Cast x to bf16 *inside* the kernel (free on the VPU) so the HBM stream
    # is a single f32 read of x, not an extra wrapper-side convert pass.
    x = x_ref[...].astype(jnp.bfloat16)

    # Linear 1 (MXU, bf16 in / f32 accumulate) + bias (f32, VPU).
    h = jnp.dot(x, w1_ref[...], preferred_element_type=jnp.float32) + b1_ref[...]

    # LeakyReLU(negative_slope=0.2) in f32.
    h = jnp.maximum(h, 0.2 * h)

    # Linear 2 (MXU, bf16 in / f32 accumulate) + bias.
    o = jnp.dot(h.astype(jnp.bfloat16), w2_ref[...],
                preferred_element_type=jnp.float32) + b2_ref[...]

    o_ref[...] = o.astype(o_ref.dtype)


def _choose_pack(model_size, hidden_size, output_size, max_w_bytes=4 << 20):
    """Row-pack factor: make the packed output ~128 lanes wide (unmasked,
    lane-dense stores) while keeping the block-diagonal packed weights small
    enough to stay resident in VMEM.  pack=1 degenerates to the plain layout
    (used automatically when the feature dims are already lane-dense)."""
    pack = max(1, 128 // max(output_size, 1))
    while pack > 1 and pack * pack * model_size * hidden_size * 2 > max_w_bytes:
        pack //= 2
    return pack


def latent_discriminator_forward(encoder_outputs, w1, b1, w2, b2, *,
                                 tile_rows=16384):
    """encoder_outputs: (seq, batch, model_size); w1: (ms, hidden); w2: (hidden, out)."""
    seq, batch, model_size = encoder_outputs.shape
    hidden_size = w1.shape[1]
    output_size = w2.shape[1]

    n_rows = seq * batch
    # Metadata-only reshape; x stays f32 in HBM (no extra convert pass).
    x2d = encoder_outputs.reshape(n_rows, model_size)

    # Lane-dense row packing (pack consecutive logical rows per physical row).
    pack = _choose_pack(model_size, hidden_size, output_size)
    n_pad = (-n_rows) % pack
    if n_pad:  # only copies when n_rows is not already a multiple of `pack`
        x2d = jnp.pad(x2d, ((0, n_pad), (0, 0)))
    n_rows_p = n_rows + n_pad
    n_packed = n_rows_p // pack
    xp = x2d.reshape(n_packed, pack * model_size)      # metadata-only reshape

    # Packed weights / biases (KiB-scale): block-diagonal W in bf16, biases f32.
    eye = jnp.eye(pack, dtype=jnp.float32)
    w1p = jnp.kron(eye, w1.astype(jnp.float32)).astype(jnp.bfloat16)
    w2p = jnp.kron(eye, w2.astype(jnp.float32)).astype(jnp.bfloat16)
    b1p = jnp.tile(b1.astype(jnp.float32).reshape(1, hidden_size), (1, pack))
    b2p = jnp.tile(b2.astype(jnp.float32).reshape(1, output_size), (1, pack))

    # Row tile (in packed rows): big tiles amortize the ~0.35us/step grid cost;
    # cap so double-buffered x+out tiles fit comfortably inside scoped VMEM on
    # every generation (v7x: 64 MiB total / 32 MiB default scoped).
    bytes_per_packed_row = pack * (model_size + output_size) * 4
    vmem_cap_tm = max(8, ((24 << 20) // (2 * bytes_per_packed_row)) // 8 * 8)
    desired = _round_up(min(max(tile_rows // pack, 8), vmem_cap_tm), 8)
    # On large problems keep >=8 parallel grid steps so the row axis can be
    # sharded across v7x's 2 TensorCores (neutral on single-TC v5e/v6e).
    if n_packed > 8 * 512:
        desired = min(desired, _round_up(pl.cdiv(n_packed, 8), 8))

    if desired >= n_packed:
        tm = n_packed        # single full-extent block (legal for any n_packed)
    else:
        tm = desired         # multiple of 8; ragged last block is masked by Pallas
    grid = (pl.cdiv(n_packed, tm),)

    out = pl.pallas_call(
        _latent_discriminator_kernel,
        out_shape=jax.ShapeDtypeStruct((n_packed, pack * output_size),
                                       encoder_outputs.dtype),
        grid_spec=pltpu.PrefetchScalarGridSpec(
            num_scalar_prefetch=0,
            grid=grid,
            in_specs=[
                pl.BlockSpec((tm, pack * model_size), lambda i: (i, 0)),      # x tile
                pl.BlockSpec((pack * model_size, pack * hidden_size),
                             lambda i: (0, 0)),                               # W1 (resident)
                pl.BlockSpec((1, pack * hidden_size), lambda i: (0, 0)),      # b1 (resident)
                pl.BlockSpec((pack * hidden_size, pack * output_size),
                             lambda i: (0, 0)),                               # W2 (resident)
                pl.BlockSpec((1, pack * output_size), lambda i: (0, 0)),      # b2 (resident)
            ],
            out_specs=pl.BlockSpec((tm, pack * output_size), lambda i: (i, 0)),
        ),
        compiler_params=pltpu.CompilerParams(
            dimension_semantics=("parallel",),
        ),
    )(xp, w1p, b1p, w2p, b2p)

    # Un-pack rows (metadata-only), drop pad rows, restore (seq, batch, out).
    out = out.reshape(n_rows_p, output_size)
    if n_pad:
        out = out[:n_rows]
    return out.reshape(seq, batch, output_size)


def init_params(key, model_size, hidden_size, output_size):
    """Deterministic init mimicking torch.nn.Linear default (uniform +-1/sqrt(fan_in))."""
    k1, k2, k3, k4 = jax.random.split(key, 4)
    bound1 = 1.0 / (model_size ** 0.5)
    bound2 = 1.0 / (hidden_size ** 0.5)
    w1 = jax.random.uniform(k1, (model_size, hidden_size), jnp.float32, -bound1, bound1)
    b1 = jax.random.uniform(k2, (hidden_size,), jnp.float32, -bound1, bound1)
    w2 = jax.random.uniform(k3, (hidden_size, output_size), jnp.float32, -bound2, bound2)
    b2 = jax.random.uniform(k4, (output_size,), jnp.float32, -bound2, bound2)
    return w1, b1, w2, b2


if __name__ == "__main__":
    # Small shapes consistent with the module:
    #   model_size (opt.model_size) = 32, hidden_size = 32, output_size = 8
    #   encoder_outputs: (seq=8, batch=2, model_size=32)
    seq, batch = 8, 2
    model_size, hidden_size, output_size = 32, 32, 8

    key = jax.random.PRNGKey(0)
    k_x, k_p = jax.random.split(key)
    encoder_outputs = jax.random.normal(k_x, (seq, batch, model_size), jnp.float32)
    w1, b1, w2, b2 = init_params(k_p, model_size, hidden_size, output_size)

    out = latent_discriminator_forward(encoder_outputs, w1, b1, w2, b2)
    out = jax.block_until_ready(out)

    # Pure-JAX reference matching the kernel's bf16-in / f32-accumulate math
    # (same semantics as the PyTorch module in eval mode, quantized to bf16;
    # block-diagonal packing is exact: zero blocks contribute exact zeros).
    xb = encoder_outputs.reshape(-1, model_size).astype(jnp.bfloat16).astype(jnp.float32)
    w1b = w1.astype(jnp.bfloat16).astype(jnp.float32)
    w2b = w2.astype(jnp.bfloat16).astype(jnp.float32)
    h_ref = xb @ w1b + b1
    h_ref = jnp.where(h_ref > 0, h_ref, 0.2 * h_ref)
    ref = (h_ref.astype(jnp.bfloat16).astype(jnp.float32) @ w2b + b2)
    ref = ref.reshape(seq, batch, output_size)

    assert out.shape == (seq, batch, output_size)
    assert jnp.allclose(out, ref, atol=1e-2, rtol=1e-2), (
        f"max abs err = {jnp.max(jnp.abs(out - ref))}")

    print("KERNEL_OK")
</pallas_src>

<mosaic_0001>
module attributes {stable_mosaic.version = 11 : i64} {
  func.func @_latent_discriminator_kernel(%arg0: i32, %arg1: memref<1x512xf32, #tpu.memory_space<vmem>>, %arg2: memref<512x512xbf16, #tpu.memory_space<vmem>>, %arg3: memref<1x512xf32, #tpu.memory_space<vmem>>, %arg4: memref<512x128xbf16, #tpu.memory_space<vmem>>, %arg5: memref<1x128xf32, #tpu.memory_space<vmem>>, %arg6: memref<1x128xf32, #tpu.memory_space<vmem>>) attributes {dimension_semantics = [#tpu.dimension_semantics<parallel>], iteration_bounds = array<i64: 1>, scalar_prefetch = 0 : i64, scratch_operands = 0 : i64, tpu.core_type = #tpu.core_type<tc>, window_params = [{transform_indices = @transform_0, window_bounds = array<i64: 1, 512>}, {pipeline_mode = #tpu.pipeline_mode<synchronous>, transform_indices = @transform_1, window_bounds = array<i64: 512, 512>}, {pipeline_mode = #tpu.pipeline_mode<synchronous>, transform_indices = @transform_2, window_bounds = array<i64: 1, 512>}, {pipeline_mode = #tpu.pipeline_mode<synchronous>, transform_indices = @transform_3, window_bounds = array<i64: 512, 128>}, {pipeline_mode = #tpu.pipeline_mode<synchronous>, transform_indices = @transform_4, window_bounds = array<i64: 1, 128>}, {transform_indices = @transform_5, window_bounds = array<i64: 1, 128>}]} {
    %c0 = arith.constant 0 : index
    %c0_0 = arith.constant 0 : index
    %0 = vector.load %arg1[%c0, %c0_0] : memref<1x512xf32, #tpu.memory_space<vmem>>, vector<1x512xf32>
    %1 = arith.truncf %0 : vector<1x512xf32> to vector<1x512xbf16>
    %c0_1 = arith.constant 0 : index
    %c0_2 = arith.constant 0 : index
    %2 = vector.load %arg2[%c0_1, %c0_2] : memref<512x512xbf16, #tpu.memory_space<vmem>>, vector<512x512xbf16>
    %cst = arith.constant dense<0.000000e+00> : vector<1x512xf32>
    %3 = tpu.matmul %1, %2, %cst {dimension_numbers = #tpu.dot_dimension_numbers<[1], [0], [0], [1], [0, 0, 1, 1], [], []>} : vector<1x512xbf16>, vector<512x512xbf16>, vector<1x512xf32> -> vector<1x512xf32>
    %c0_3 = arith.constant 0 : index
    %c0_4 = arith.constant 0 : index
    %4 = vector.load %arg3[%c0_3, %c0_4] : memref<1x512xf32, #tpu.memory_space<vmem>>, vector<1x512xf32>
    %5 = arith.addf %3, %4 : vector<1x512xf32>
    %cst_5 = arith.constant 2.000000e-01 : f32
    %6 = vector.broadcast %cst_5 : f32 to vector<1x512xf32>
    %7 = arith.mulf %6, %5 : vector<1x512xf32>
    %8 = arith.maximumf %5, %7 : vector<1x512xf32>
    %9 = arith.truncf %8 : vector<1x512xf32> to vector<1x512xbf16>
    %c0_6 = arith.constant 0 : index
    %c0_7 = arith.constant 0 : index
    %10 = vector.load %arg4[%c0_6, %c0_7] : memref<512x128xbf16, #tpu.memory_space<vmem>>, vector<512x128xbf16>
    %cst_8 = arith.constant dense<0.000000e+00> : vector<1x128xf32>
    %11 = tpu.matmul %9, %10, %cst_8 {dimension_numbers = #tpu.dot_dimension_numbers<[1], [0], [0], [1], [0, 0, 1, 1], [], []>} : vector<1x512xbf16>, vector<512x128xbf16>, vector<1x128xf32> -> vector<1x128xf32>
    %c0_9 = arith.constant 0 : index
    %c0_10 = arith.constant 0 : index
    %12 = vector.load %arg5[%c0_9, %c0_10] : memref<1x128xf32, #tpu.memory_space<vmem>>, vector<1x128xf32>
    %13 = arith.addf %11, %12 : vector<1x128xf32>
    %c0_11 = arith.constant 0 : index
    %c0_12 = arith.constant 0 : index
    %14 = vector.load %arg6[%c0_11, %c0_12] : memref<1x128xf32, #tpu.memory_space<vmem>>, vector<1x128xf32>
    tpu.vector_store %arg6[%c0_11, %c0_12], %13 {strides = array<i32>} : memref<1x128xf32, #tpu.memory_space<vmem>>, vector<1x128xf32>,
    return
  }
  func.func @transform_0(%arg0: i32) -> (i32, i32) {
    %c0_i32 = arith.constant 0 : i32
    %c0_i32_0 = arith.constant 0 : i32
    return %arg0, %c0_i32 : i32, i32
  }
  func.func @transform_1(%arg0: i32) -> (i32, i32) {
    %c0_i32 = arith.constant 0 : i32
    %c0_i32_0 = arith.constant 0 : i32
    %c0_i32_1 = arith.constant 0 : i32
    return %c0_i32, %c0_i32_0 : i32, i32
  }
  func.func @transform_2(%arg0: i32) -> (i32, i32) {
    %c0_i32 = arith.constant 0 : i32
    %c0_i32_0 = arith.constant 0 : i32
    %c0_i32_1 = arith.constant 0 : i32
    return %c0_i32, %c0_i32_0 : i32, i32
  }
  func.func @transform_3(%arg0: i32) -> (i32, i32) {
    %c0_i32 = arith.constant 0 : i32
    %c0_i32_0 = arith.constant 0 : i32
    %c0_i32_1 = arith.constant 0 : i32
    return %c0_i32, %c0_i32_0 : i32, i32
  }
  func.func @transform_4(%arg0: i32) -> (i32, i32) {
    %c0_i32 = arith.constant 0 : i32
    %c0_i32_0 = arith.constant 0 : i32
    %c0_i32_1 = arith.constant 0 : i32
    return %c0_i32, %c0_i32_0 : i32, i32
  }
  func.func @transform_5(%arg0: i32) -> (i32, i32) {
    %c0_i32 = arith.constant 0 : i32
    %c0_i32_0 = arith.constant 0 : i32
    return %arg0, %c0_i32 : i32, i32
  }
}

</mosaic_0001>

<llo_original>
// kernel: tpu_custom_call.1
$region0: #{tpu_custom_call.1}
  #allocation0 [shape = 'u32[]', space=smem, size = 0x4, offset = 0x4, fixed_abs, tag = 'smem constant byte address 0x4 - core index']
  #allocation1 [shape = 'u32[72,128]{1,0:T(1,128)}', space=vmem, size = 0x9000, scoped, tag = 'internal scratch']
  %s0 = inlined_call_operand.hbm [shape: f32[1,512], index: 0, kind: input, shape index: {}]
  %s1 = inlined_call_operand.hbm [shape: bf16[512,512], index: 1, kind: input, shape index: {}]
  %s2 = inlined_call_operand.hbm [shape: f32[1,512], index: 2, kind: input, shape index: {}]
  %s3 = inlined_call_operand.hbm [shape: bf16[512,128], index: 3, kind: input, shape index: {}]
  %s4 = inlined_call_operand.vmem [shape: f32[1,128], index: 4, kind: input, shape index: {}]
  %s5 = inlined_call_operand.hbm [shape: f32[1,128], index: 5, kind: output, shape index: {}]
  %s6 = sld [smem:[#allocation0]]
  $region46: #{tpu_custom_call.1} parent=0
    _
  %s8 = ssub.s32 1, %s6
  %s9 = scalar_select 0, %s8, %s6
  $region1: #{tpu_custom_call.1} parent=0
    #allocation2 [shape = 'u8[2048]{0}', space=vmem, size = 0x800, scoped, tag = 'input window, operand 0, single buffered']
    #allocation3 [shape = 's32[1]{0}', space=sflag, size = 0x4, scoped, tag = 'scoped memory for tpu_custom_call.1']
    #allocation4 [shape = 's32[1]{0}', space=sflag, size = 0x4, scoped, tag = 'scoped memory for tpu_custom_call.1']
    #allocation5 [shape = 'u8[524288]{0}', space=vmem, size = 0x80000, scoped, tag = 'input window, operand 1, single buffered']
    #allocation6 [shape = 's32[1]{0}', space=sflag, size = 0x4, scoped, tag = 'scoped memory for tpu_custom_call.1']
    #allocation7 [shape = 'u8[2048]{0}', space=vmem, size = 0x800, scoped, tag = 'input window, operand 2, single buffered']
    #allocation8 [shape = 'u8[131072]{0}', space=vmem, size = 0x20000, scoped, tag = 'input window, operand 3, single buffered']
    #allocation9 [shape = 's32[1]{0}', space=sflag, size = 0x4, scoped, tag = 'scoped memory for tpu_custom_call.1']
    #allocation10 [shape = 'u8[512]{0}', space=vmem, size = 0x400, scoped, tag = 'output window, operand 0, single buffered']
    %10 = vsyncpa [#allocation3], 0
    %11 = vsyncpa [#allocation6], 0
    %12 = vsyncpa [#allocation9], 0
    %13 = vsyncpa [#allocation4], 0
    // Predicated region
    $region2: #{tpu_custom_call.1} parent=1 // pred_check
      _
    $region3: #{tpu_custom_call.1} parent=1 // pred_check_branch
      %15 = sbr.rel (0) target = $region5
    $region4: #{tpu_custom_call.1} parent=1 // pred_region
      %17 = vsyncadd [#allocation3], 0
      %s19 = sshll.u32 %s0, 4
      %s20 = int_to_ptr.hbm [resolvable:$true] %s19
      %s21 = sshll.u32 [#allocation2], 4
      %s22 = int_to_ptr.vmem [resolvable:$true] %s21
      %24 = dma.hbm_to_vmem [thread:$0]  %s20, 64, %s22, [#allocation3]
    $region5: #{tpu_custom_call.1} parent=1 // pred_fallthru
      _
    // Predicated region
    $region6: #{tpu_custom_call.1} parent=1 // pred_check
      _
    $region7: #{tpu_custom_call.1} parent=1 // pred_check_branch
      %26 = sbr.rel (0) target = $region9
    $region8: #{tpu_custom_call.1} parent=1 // pred_region
      %28 = vsyncadd [#allocation6], 0
      %s29 = sshll.u32 %s1, 4
      %s30 = int_to_ptr.hbm [resolvable:$true] %s29
      %s31 = sshll.u32 [#allocation5], 4
      %s32 = int_to_ptr.vmem [resolvable:$true] %s31
      %37 = dma.hbm_to_vmem [thread:$0]  %s30, 16384, %s32, [#allocation6], 256, 256, 16
    $region9: #{tpu_custom_call.1} parent=1 // pred_fallthru
      _
    // Predicated region
    $region10: #{tpu_custom_call.1} parent=1 // pred_check
      _
    $region11: #{tpu_custom_call.1} parent=1 // pred_check_branch
      %39 = sbr.rel (0) target = $region13
    $region12: #{tpu_custom_call.1} parent=1 // pred_region
      %41 = vsyncadd [#allocation6], 0
      %s43 = sshll.u32 %s2, 4
      %s44 = int_to_ptr.hbm [resolvable:$true] %s43
      %s45 = sshll.u32 [#allocation7], 4
      %s46 = int_to_ptr.vmem [resolvable:$true] %s45
      %48 = dma.hbm_to_vmem [thread:$0]  %s44, 64, %s46, [#allocation6]
    $region13: #{tpu_custom_call.1} parent=1 // pred_fallthru
      _
    // Predicated region
    $region14: #{tpu_custom_call.1} parent=1 // pred_check
      _
    $region15: #{tpu_custom_call.1} parent=1 // pred_check_branch
      %50 = sbr.rel (0) target = $region17
    $region16: #{tpu_custom_call.1} parent=1 // pred_region
      %52 = vsyncadd [#allocation9], 0
      %s53 = sshll.u32 %s3, 4
      %s54 = int_to_ptr.hbm [resolvable:$true] %s53
      %s55 = sshll.u32 [#allocation8], 4
      %s56 = int_to_ptr.vmem [resolvable:$true] %s55
      %61 = dma.hbm_to_vmem [thread:$0]  %s54, 4096, %s56, [#allocation9], 64, 64, 4
    $region17: #{tpu_custom_call.1} parent=1 // pred_fallthru
      _
    // Predicated region
    $region18: #{tpu_custom_call.1} parent=1 // pred_check
      _
    $region19: #{tpu_custom_call.1} parent=1 // pred_check_branch
      %63 = sbr.rel (0) target = $region21
    $region20: #{tpu_custom_call.1} parent=1 // pred_region
      _
    $region21: #{tpu_custom_call.1} parent=1 // pred_fallthru
      _
    // Predicated region
    $region22: #{tpu_custom_call.1} parent=1 // pred_check
      _
    $region23: #{tpu_custom_call.1} parent=1 // pred_check_branch
      %65 = sbr.rel (0) target = $region25
    $region24: #{tpu_custom_call.1} parent=1 // pred_region
      %67 = dma.done [#allocation3], 64
    $region25: #{tpu_custom_call.1} parent=1 // pred_fallthru
      _
    // Predicated region
    $region26: #{tpu_custom_call.1} parent=1 // pred_check
      _
    $region27: #{tpu_custom_call.1} parent=1 // pred_check_branch
      %69 = sbr.rel (0) target = $region29
    $region28: #{tpu_custom_call.1} parent=1 // pred_region
      %71 = dma.done [#allocation6], 16384
    $region29: #{tpu_custom_call.1} parent=1 // pred_fallthru
      _
    // Predicated region
    $region30: #{tpu_custom_call.1} parent=1 // pred_check
      _
    $region31: #{tpu_custom_call.1} parent=1 // pred_check_branch
      %73 = sbr.rel (0) target = $region33
    $region32: #{tpu_custom_call.1} parent=1 // pred_region
      %75 = dma.done [#allocation6], 64
    $region33: #{tpu_custom_call.1} parent=1 // pred_fallthru
      _
    // Predicated region
    $region34: #{tpu_custom_call.1} parent=1 // pred_check
      _
    $region35: #{tpu_custom_call.1} parent=1 // pred_check_branch
      %77 = sbr.rel (0) target = $region37
    $region36: #{tpu_custom_call.1} parent=1 // pred_region
      %79 = dma.done [#allocation9], 4096
    $region37: #{tpu_custom_call.1} parent=1 // pred_fallthru
      _
    %v80 = vld [vmem:[#allocation2] sm:$0xf]
    %v82 = vperm.slane %v80, 0
    %v83 = vperm.slane %v80, 1
    %v84 = vperm.slane %v80, 2
    %v85 = vperm.slane %v80, 3
    %v90 = vpack.c.bf16 %v82, %v82
    %v91 = vpack.c.bf16 %v83, %v83
    %v92 = vpack.c.bf16 %v84, %v84
    %v93 = vpack.c.bf16 %v85, %v85
    %v94 = vld [vmem:[#allocation5] sm:$0xff]
    %v95 = vld [vmem:[#allocation5 + $0x8] sm:$0xff]
    %v96 = vld [vmem:[#allocation5 + $0x10] sm:$0xff]
    %v97 = vld [vmem:[#allocation5 + $0x18] sm:$0xff]
    %v98 = vld [vmem:[#allocation5 + $0x20] sm:$0xff]
    %v99 = vld [vmem:[#allocation5 + $0x28] sm:$0xff]
    %v100 = vld [vmem:[#allocation5 + $0x30] sm:$0xff]
    %v101 = vld [vmem:[#allocation5 + $0x38] sm:$0xff]
    %v102 = vld [vmem:[#allocation5 + $0x40] sm:$0xff]
    %v103 = vld [vmem:[#allocation5 + $0x48] sm:$0xff]
    %v104 = vld [vmem:[#allocation5 + $0x50] sm:$0xff]
    %v105 = vld [vmem:[#allocation5 + $0x58] sm:$0xff]
    %v106 = vld [vmem:[#allocation5 + $0x60] sm:$0xff]
    %v107 = vld [vmem:[#allocation5 + $0x68] sm:$0xff]
    %v108 = vld [vmem:[#allocation5 + $0x70] sm:$0xff]
    %v109 = vld [vmem:[#allocation5 + $0x78] sm:$0xff]
    %v110 = vld [vmem:[#allocation5 + $0x80] sm:$0xff]
    %v111 = vld [vmem:[#allocation5 + $0x88] sm:$0xff]
    %v112 = vld [vmem:[#allocation5 + $0x90] sm:$0xff]
    %v113 = vld [vmem:[#allocation5 + $0x98] sm:$0xff]
    %v114 = vld [vmem:[#allocation5 + $0xa0] sm:$0xff]
    %v115 = vld [vmem:[#allocation5 + $0xa8] sm:$0xff]
    %v116 = vld [vmem:[#allocation5 + $0xb0] sm:$0xff]
    %v117 = vld [vmem:[#allocation5 + $0xb8] sm:$0xff]
    %v118 = vld [vmem:[#allocation5 + $0xc0] sm:$0xff]
    %v119 = vld [vmem:[#allocation5 + $0xc8] sm:$0xff]
    %v120 = vld [vmem:[#allocation5 + $0xd0] sm:$0xff]
    %v121 = vld [vmem:[#allocation5 + $0xd8] sm:$0xff]
    %v122 = vld [vmem:[#allocation5 + $0xe0] sm:$0xff]
    %v123 = vld [vmem:[#allocation5 + $0xe8] sm:$0xff]
    %v124 = vld [vmem:[#allocation5 + $0xf0] sm:$0xff]
    %v125 = vld [vmem:[#allocation5 + $0xf8] sm:$0xff]
    %v126 = vld [vmem:[#allocation5 + $0x100] sm:$0xff]
    %v127 = vld [vmem:[#allocation5 + $0x108] sm:$0xff]
    %v128 = vld [vmem:[#allocation5 + $0x110] sm:$0xff]
    %v129 = vld [vmem:[#allocation5 + $0x118] sm:$0xff]
    %v130 = vld [vmem:[#allocation5 + $0x120] sm:$0xff]
    %v131 = vld [vmem:[#allocation5 + $0x128] sm:$0xff]
    %v132 = vld [vmem:[#allocation5 + $0x130] sm:$0xff]
    %v133 = vld [vmem:[#allocation5 + $0x138] sm:$0xff]
    %v134 = vld [vmem:[#allocation5 + $0x140] sm:$0xff]
    %v135 = vld [vmem:[#allocation5 + $0x148] sm:$0xff]
    %v136 = vld [vmem:[#allocation5 + $0x150] sm:$0xff]
    %v137 = vld [vmem:[#allocation5 + $0x158] sm:$0xff]
    %v138 = vld [vmem:[#allocation5 + $0x160] sm:$0xff]
    %v139 = vld [vmem:[#allocation5 + $0x168] sm:$0xff]
    %v140 = vld [vmem:[#allocation5 + $0x170] sm:$0xff]
    %v141 = vld [vmem:[#allocation5 + $0x178] sm:$0xff]
    %v142 = vld [vmem:[#allocation5 + $0x180] sm:$0xff]
    %v143 = vld [vmem:[#allocation5 + $0x188] sm:$0xff]
    %v144 = vld [vmem:[#allocation5 + $0x190] sm:$0xff]
    %v145 = vld [vmem:[#allocation5 + $0x198] sm:$0xff]
    %v146 = vld [vmem:[#allocation5 + $0x1a0] sm:$0xff]
    %v147 = vld [vmem:[#allocation5 + $0x1a8] sm:$0xff]
    %v148 = vld [vmem:[#allocation5 + $0x1b0] sm:$0xff]
    %v149 = vld [vmem:[#allocation5 + $0x1b8] sm:$0xff]
    %v150 = vld [vmem:[#allocation5 + $0x1c0] sm:$0xff]
    %v151 = vld [vmem:[#allocation5 + $0x1c8] sm:$0xff]
    %v152 = vld [vmem:[#allocation5 + $0x1d0] sm:$0xff]
    %v153 = vld [vmem:[#allocation5 + $0x1d8] sm:$0xff]
    %v154 = vld [vmem:[#allocation5 + $0x1e0] sm:$0xff]
    %v155 = vld [vmem:[#allocation5 + $0x1e8] sm:$0xff]
    %v156 = vld [vmem:[#allocation5 + $0x1f0] sm:$0xff]
    %v157 = vld [vmem:[#allocation5 + $0x1f8] sm:$0xff]
    %v158 = vld [vmem:[#allocation5 + $0x200] sm:$0xff]
    %v159 = vld [vmem:[#allocation5 + $0x208] sm:$0xff]
    %v160 = vld [vmem:[#allocation5 + $0x210] sm:$0xff]
    %v161 = vld [vmem:[#allocation5 + $0x218] sm:$0xff]
    %v162 = vld [vmem:[#allocation5 + $0x220] sm:$0xff]
    %v163 = vld [vmem:[#allocation5 + $0x228] sm:$0xff]
    %v164 = vld [vmem:[#allocation5 + $0x230] sm:$0xff]
    %v165 = vld [vmem:[#allocation5 + $0x238] sm:$0xff]
    %v166 = vld [vmem:[#allocation5 + $0x240] sm:$0xff]
    %v167 = vld [vmem:[#allocation5 + $0x248] sm:$0xff]
    %v168 = vld [vmem:[#allocation5 + $0x250] sm:$0xff]
    %v169 = vld [vmem:[#allocation5 + $0x258] sm:$0xff]
    %v170 = vld [vmem:[#allocation5 + $0x260] sm:$0xff]
    %v171 = vld [vmem:[#allocation5 + $0x268] sm:$0xff]
    %v172 = vld [vmem:[#allocation5 + $0x270] sm:$0xff]
    %v173 = vld [vmem:[#allocation5 + $0x278] sm:$0xff]
    %v174 = vld [vmem:[#allocation5 + $0x280] sm:$0xff]
    %v175 = vld [vmem:[#allocation5 + $0x288] sm:$0xff]
    %v176 = vld [vmem:[#allocation5 + $0x290] sm:$0xff]
    %v177 = vld [vmem:[#allocation5 + $0x298] sm:$0xff]
    %v178 = vld [vmem:[#allocation5 + $0x2a0] sm:$0xff]
    %v179 = vld [vmem:[#allocation5 + $0x2a8] sm:$0xff]
    %v180 = vld [vmem:[#allocation5 + $0x2b0] sm:$0xff]
    %v181 = vld [vmem:[#allocation5 + $0x2b8] sm:$0xff]
    %v182 = vld [vmem:[#allocation5 + $0x2c0] sm:$0xff]
    %v183 = vld [vmem:[#allocation5 + $0x2c8] sm:$0xff]
    %v184 = vld [vmem:[#allocation5 + $0x2d0] sm:$0xff]
    %v185 = vld [vmem:[#allocation5 + $0x2d8] sm:$0xff]
    %v186 = vld [vmem:[#allocation5 + $0x2e0] sm:$0xff]
    %v187 = vld [vmem:[#allocation5 + $0x2e8] sm:$0xff]
    %v188 = vld [vmem:[#allocation5 + $0x2f0] sm:$0xff]
    %v189 = vld [vmem:[#allocation5 + $0x2f8] sm:$0xff]
    %v190 = vld [vmem:[#allocation5 + $0x300] sm:$0xff]
    %v191 = vld [vmem:[#allocation5 + $0x308] sm:$0xff]
    %v192 = vld [vmem:[#allocation5 + $0x310] sm:$0xff]
    %v193 = vld [vmem:[#allocation5 + $0x318] sm:$0xff]
    %v194 = vld [vmem:[#allocation5 + $0x320] sm:$0xff]
    %v195 = vld [vmem:[#allocation5 + $0x328] sm:$0xff]
    %v196 = vld [vmem:[#allocation5 + $0x330] sm:$0xff]
    %v197 = vld [vmem:[#allocation5 + $0x338] sm:$0xff]
    %v198 = vld [vmem:[#allocation5 + $0x340] sm:$0xff]
    %v199 = vld [vmem:[#allocation5 + $0x348] sm:$0xff]
    %v200 = vld [vmem:[#allocation5 + $0x350] sm:$0xff]
    %v201 = vld [vmem:[#allocation5 + $0x358] sm:$0xff]
    %v202 = vld [vmem:[#allocation5 + $0x360] sm:$0xff]
    %v203 = vld [vmem:[#allocation5 + $0x368] sm:$0xff]
    %v204 = vld [vmem:[#allocation5 + $0x370] sm:$0xff]
    %v205 = vld [vmem:[#allocation5 + $0x378] sm:$0xff]
    %v206 = vld [vmem:[#allocation5 + $0x380] sm:$0xff]
    %v207 = vld [vmem:[#allocation5 + $0x388] sm:$0xff]
    %v208 = vld [vmem:[#allocation5 + $0x390] sm:$0xff]
    %v209 = vld [vmem:[#allocation5 + $0x398] sm:$0xff]
    %v210 = vld [vmem:[#allocation5 + $0x3a0] sm:$0xff]
    %v211 = vld [vmem:[#allocation5 + $0x3a8] sm:$0xff]
    %v212 = vld [vmem:[#allocation5 + $0x3b0] sm:$0xff]
    %v213 = vld [vmem:[#allocation5 + $0x3b8] sm:$0xff]
    %v214 = vld [vmem:[#allocation5 + $0x3c0] sm:$0xff]
    %v215 = vld [vmem:[#allocation5 + $0x3c8] sm:$0xff]
    %v216 = vld [vmem:[#allocation5 + $0x3d0] sm:$0xff]
    %v217 = vld [vmem:[#allocation5 + $0x3d8] sm:$0xff]
    %v218 = vld [vmem:[#allocation5 + $0x3e0] sm:$0xff]
    %v219 = vld [vmem:[#allocation5 + $0x3e8] sm:$0xff]
    %v220 = vld [vmem:[#allocation5 + $0x3f0] sm:$0xff]
    %v221 = vld [vmem:[#allocation5 + $0x3f8] sm:$0xff]
    %v222 = vld [vmem:[#allocation7] sm:$0xf]
    %v351 = vunpack.c.l.b16 %v94
    %v352 = vunpack.c.h.b16 %v94
    %v353 = vunpack.c.l.b16 %v95
    %v354 = vunpack.c.h.b16 %v95
    %v355 = vunpack.c.l.b16 %v96
    %v356 = vunpack.c.h.b16 %v96
    %v357 = vunpack.c.l.b16 %v97
    %v358 = vunpack.c.h.b16 %v97
    %v359 = vunpack.c.l.b16 %v98
    %v360 = vunpack.c.h.b16 %v98
    %v361 = vunpack.c.l.b16 %v99
    %v362 = vunpack.c.h.b16 %v99
    %v363 = vunpack.c.l.b16 %v100
    %v364 = vunpack.c.h.b16 %v100
    %v365 = vunpack.c.l.b16 %v101
    %v366 = vunpack.c.h.b16 %v101
    %v367 = vunpack.c.l.b16 %v102
    %v368 = vunpack.c.h.b16 %v102
    %v369 = vunpack.c.l.b16 %v103
    %v370 = vunpack.c.h.b16 %v103
    %v371 = vunpack.c.l.b16 %v104
    %v372 = vunpack.c.h.b16 %v104
    %v373 = vunpack.c.l.b16 %v105
    %v374 = vunpack.c.h.b16 %v105
    %v375 = vunpack.c.l.b16 %v106
    %v376 = vunpack.c.h.b16 %v106
    %v377 = vunpack.c.l.b16 %v107
    %v378 = vunpack.c.h.b16 %v107
    %v379 = vunpack.c.l.b16 %v108
    %v380 = vunpack.c.h.b16 %v108
    %v381 = vunpack.c.l.b16 %v109
    %v382 = vunpack.c.h.b16 %v109
    %v383 = vunpack.c.l.b16 %v110
    %v384 = vunpack.c.h.b16 %v110
    %v385 = vunpack.c.l.b16 %v111
    %v386 = vunpack.c.h.b16 %v111
    %v387 = vunpack.c.l.b16 %v112
    %v388 = vunpack.c.h.b16 %v112
    %v389 = vunpack.c.l.b16 %v113
    %v390 = vunpack.c.h.b16 %v113
    %v391 = vunpack.c.l.b16 %v114
    %v392 = vunpack.c.h.b16 %v114
    %v393 = vunpack.c.l.b16 %v115
    %v394 = vunpack.c.h.b16 %v115
    %v395 = vunpack.c.l.b16 %v116
    %v396 = vunpack.c.h.b16 %v116
    %v397 = vunpack.c.l.b16 %v117
    %v398 = vunpack.c.h.b16 %v117
    %v399 = vunpack.c.l.b16 %v118
    %v400 = vunpack.c.h.b16 %v118
    %v401 = vunpack.c.l.b16 %v119
    %v402 = vunpack.c.h.b16 %v119
    %v403 = vunpack.c.l.b16 %v120
    %v404 = vunpack.c.h.b16 %v120
    %v405 = vunpack.c.l.b16 %v121
    %v406 = vunpack.c.h.b16 %v121
    %v407 = vunpack.c.l.b16 %v122
    %v408 = vunpack.c.h.b16 %v122
    %v409 = vunpack.c.l.b16 %v123
    %v410 = vunpack.c.h.b16 %v123
    %v411 = vunpack.c.l.b16 %v124
    %v412 = vunpack.c.h.b16 %v124
    %v413 = vunpack.c.l.b16 %v125
    %v414 = vunpack.c.h.b16 %v125
    %v415 = vunpack.c.l.b16 %v126
    %v416 = vunpack.c.h.b16 %v126
    %v417 = vunpack.c.l.b16 %v127
    %v418 = vunpack.c.h.b16 %v127
    %v419 = vunpack.c.l.b16 %v128
    %v420 = vunpack.c.h.b16 %v128
    %v421 = vunpack.c.l.b16 %v129
    %v422 = vunpack.c.h.b16 %v129
    %v423 = vunpack.c.l.b16 %v130
    %v424 = vunpack.c.h.b16 %v130
    %v425 = vunpack.c.l.b16 %v131
    %v426 = vunpack.c.h.b16 %v131
    %v427 = vunpack.c.l.b16 %v132
    %v428 = vunpack.c.h.b16 %v132
    %v429 = vunpack.c.l.b16 %v133
    %v430 = vunpack.c.h.b16 %v133
    %v431 = vunpack.c.l.b16 %v134
    %v432 = vunpack.c.h.b16 %v134
    %v433 = vunpack.c.l.b16 %v135
    %v434 = vunpack.c.h.b16 %v135
    %v435 = vunpack.c.l.b16 %v136
    %v436 = vunpack.c.h.b16 %v136
    %v437 = vunpack.c.l.b16 %v137
    %v438 = vunpack.c.h.b16 %v137
    %v439 = vunpack.c.l.b16 %v138
    %v440 = vunpack.c.h.b16 %v138
    %v441 = vunpack.c.l.b16 %v139
    %v442 = vunpack.c.h.b16 %v139
    %v443 = vunpack.c.l.b16 %v140
    %v444 = vunpack.c.h.b16 %v140
    %v445 = vunpack.c.l.b16 %v141
    %v446 = vunpack.c.h.b16 %v141
    %v447 = vunpack.c.l.b16 %v142
    %v448 = vunpack.c.h.b16 %v142
    %v449 = vunpack.c.l.b16 %v143
    %v450 = vunpack.c.h.b16 %v143
    %v451 = vunpack.c.l.b16 %v144
    %v452 = vunpack.c.h.b16 %v144
    %v453 = vunpack.c.l.b16 %v145
    %v454 = vunpack.c.h.b16 %v145
    %v455 = vunpack.c.l.b16 %v146
    %v456 = vunpack.c.h.b16 %v146
    %v457 = vunpack.c.l.b16 %v147
    %v458 = vunpack.c.h.b16 %v147
    %v459 = vunpack.c.l.b16 %v148
    %v460 = vunpack.c.h.b16 %v148
    %v461 = vunpack.c.l.b16 %v149
    %v462 = vunpack.c.h.b16 %v149
    %v463 = vunpack.c.l.b16 %v150
    %v464 = vunpack.c.h.b16 %v150
    %v465 = vunpack.c.l.b16 %v151
    %v466 = vunpack.c.h.b16 %v151
    %v467 = vunpack.c.l.b16 %v152
    %v468 = vunpack.c.h.b16 %v152
    %v469 = vunpack.c.l.b16 %v153
    %v470 = vunpack.c.h.b16 %v153
    %v471 = vunpack.c.l.b16 %v154
    %v472 = vunpack.c.h.b16 %v154
    %v473 = vunpack.c.l.b16 %v155
    %v474 = vunpack.c.h.b16 %v155
    %v475 = vunpack.c.l.b16 %v156
    %v476 = vunpack.c.h.b16 %v156
    %v477 = vunpack.c.l.b16 %v157
    %v478 = vunpack.c.h.b16 %v157
    %v479 = vunpack.c.l.b16 %v158
    %v480 = vunpack.c.h.b16 %v158
    %v481 = vunpack.c.l.b16 %v159
    %v482 = vunpack.c.h.b16 %v159
    %v483 = vunpack.c.l.b16 %v160
    %v484 = vunpack.c.h.b16 %v160
    %v485 = vunpack.c.l.b16 %v161
    %v486 = vunpack.c.h.b16 %v161
    %v487 = vunpack.c.l.b16 %v162
    %v488 = vunpack.c.h.b16 %v162
    %v489 = vunpack.c.l.b16 %v163
    %v490 = vunpack.c.h.b16 %v163
    %v491 = vunpack.c.l.b16 %v164
    %v492 = vunpack.c.h.b16 %v164
    %v493 = vunpack.c.l.b16 %v165
    %v494 = vunpack.c.h.b16 %v165
    %v495 = vunpack.c.l.b16 %v166
    %v496 = vunpack.c.h.b16 %v166
    %v497 = vunpack.c.l.b16 %v167
    %v498 = vunpack.c.h.b16 %v167
    %v499 = vunpack.c.l.b16 %v168
    %v500 = vunpack.c.h.b16 %v168
    %v501 = vunpack.c.l.b16 %v169
    %v502 = vunpack.c.h.b16 %v169
    %v503 = vunpack.c.l.b16 %v170
    %v504 = vunpack.c.h.b16 %v170
    %v505 = vunpack.c.l.b16 %v171
    %v506 = vunpack.c.h.b16 %v171
    %v507 = vunpack.c.l.b16 %v172
    %v508 = vunpack.c.h.b16 %v172
    %v509 = vunpack.c.l.b16 %v173
    %v510 = vunpack.c.h.b16 %v173
    %v511 = vunpack.c.l.b16 %v174
    %v512 = vunpack.c.h.b16 %v174
    %v513 = vunpack.c.l.b16 %v175
    %v514 = vunpack.c.h.b16 %v175
    %v515 = vunpack.c.l.b16 %v176
    %v516 = vunpack.c.h.b16 %v176
    %v517 = vunpack.c.l.b16 %v177
    %v518 = vunpack.c.h.b16 %v177
    %v519 = vunpack.c.l.b16 %v178
    %v520 = vunpack.c.h.b16 %v178
    %v521 = vunpack.c.l.b16 %v179
    %v522 = vunpack.c.h.b16 %v179
    %v523 = vunpack.c.l.b16 %v180
    %v524 = vunpack.c.h.b16 %v180
    %v525 = vunpack.c.l.b16 %v181
    %v526 = vunpack.c.h.b16 %v181
    %v527 = vunpack.c.l.b16 %v182
    %v528 = vunpack.c.h.b16 %v182
    %v529 = vunpack.c.l.b16 %v183
    %v530 = vunpack.c.h.b16 %v183
    %v531 = vunpack.c.l.b16 %v184
    %v532 = vunpack.c.h.b16 %v184
    %v533 = vunpack.c.l.b16 %v185
    %v534 = vunpack.c.h.b16 %v185
    %v535 = vunpack.c.l.b16 %v186
    %v536 = vunpack.c.h.b16 %v186
    %v537 = vunpack.c.l.b16 %v187
    %v538 = vunpack.c.h.b16 %v187
    %v539 = vunpack.c.l.b16 %v188
    %v540 = vunpack.c.h.b16 %v188
    %v541 = vunpack.c.l.b16 %v189
    %v542 = vunpack.c.h.b16 %v189
    %v543 = vunpack.c.l.b16 %v190
    %v544 = vunpack.c.h.b16 %v190
    %v545 = vunpack.c.l.b16 %v191
    %v546 = vunpack.c.h.b16 %v191
    %v547 = vunpack.c.l.b16 %v192
    %v548 = vunpack.c.h.b16 %v192
    %v549 = vunpack.c.l.b16 %v193
    %v550 = vunpack.c.h.b16 %v193
    %v551 = vunpack.c.l.b16 %v194
    %v552 = vunpack.c.h.b16 %v194
    %v553 = vunpack.c.l.b16 %v195
    %v554 = vunpack.c.h.b16 %v195
    %v555 = vunpack.c.l.b16 %v196
    %v556 = vunpack.c.h.b16 %v196
    %v557 = vunpack.c.l.b16 %v197
    %v558 = vunpack.c.h.b16 %v197
    %v559 = vunpack.c.l.b16 %v198
    %v560 = vunpack.c.h.b16 %v198
    %v561 = vunpack.c.l.b16 %v199
    %v562 = vunpack.c.h.b16 %v199
    %v563 = vunpack.c.l.b16 %v200
    %v564 = vunpack.c.h.b16 %v200
    %v565 = vunpack.c.l.b16 %v201
    %v566 = vunpack.c.h.b16 %v201
    %v567 = vunpack.c.l.b16 %v202
    %v568 = vunpack.c.h.b16 %v202
    %v569 = vunpack.c.l.b16 %v203
    %v570 = vunpack.c.h.b16 %v203
    %v571 = vunpack.c.l.b16 %v204
    %v572 = vunpack.c.h.b16 %v204
    %v573 = vunpack.c.l.b16 %v205
    %v574 = vunpack.c.h.b16 %v205
    %v575 = vunpack.c.l.b16 %v206
    %v576 = vunpack.c.h.b16 %v206
    %v577 = vunpack.c.l.b16 %v207
    %v578 = vunpack.c.h.b16 %v207
    %v579 = vunpack.c.l.b16 %v208
    %v580 = vunpack.c.h.b16 %v208
    %v581 = vunpack.c.l.b16 %v209
    %v582 = vunpack.c.h.b16 %v209
    %v583 = vunpack.c.l.b16 %v210
    %v584 = vunpack.c.h.b16 %v210
    %v585 = vunpack.c.l.b16 %v211
    %v586 = vunpack.c.h.b16 %v211
    %v587 = vunpack.c.l.b16 %v212
    %v588 = vunpack.c.h.b16 %v212
    %v589 = vunpack.c.l.b16 %v213
    %v590 = vunpack.c.h.b16 %v213
    %v591 = vunpack.c.l.b16 %v214
    %v592 = vunpack.c.h.b16 %v214
    %v593 = vunpack.c.l.b16 %v215
    %v594 = vunpack.c.h.b16 %v215
    %v595 = vunpack.c.l.b16 %v216
    %v596 = vunpack.c.h.b16 %v216
    %v597 = vunpack.c.l.b16 %v217
    %v598 = vunpack.c.h.b16 %v217
    %v599 = vunpack.c.l.b16 %v218
    %v600 = vunpack.c.h.b16 %v218
    %v601 = vunpack.c.l.b16 %v219
    %v602 = vunpack.c.h.b16 %v219
    %v603 = vunpack.c.l.b16 %v220
    %v604 = vunpack.c.h.b16 %v220
    %v605 = vunpack.c.l.b16 %v221
    %v606 = vunpack.c.h.b16 %v221
    %v607 = vpack.c.b16 %v355, %v351
    %v608 = vpack.c.b16 %v356, %v352
    %v609 = vpack.c.b16 %v357, %v353
    %v610 = vpack.c.b16 %v358, %v354
    %v611 = vpack.c.b16 %v363, %v359
    %v612 = vpack.c.b16 %v364, %v360
    %v613 = vpack.c.b16 %v365, %v361
    %v614 = vpack.c.b16 %v366, %v362
    %v615 = vpack.c.b16 %v371, %v367
    %v616 = vpack.c.b16 %v372, %v368
    %v617 = vpack.c.b16 %v373, %v369
    %v618 = vpack.c.b16 %v374, %v370
    %v619 = vpack.c.b16 %v379, %v375
    %v620 = vpack.c.b16 %v380, %v376
    %v621 = vpack.c.b16 %v381, %v377
    %v622 = vpack.c.b16 %v382, %v378
    %v623 = vpack.c.b16 %v387, %v383
    %v624 = vpack.c.b16 %v388, %v384
    %v625 = vpack.c.b16 %v389, %v385
    %v626 = vpack.c.b16 %v390, %v386
    %v627 = vpack.c.b16 %v395, %v391
    %v628 = vpack.c.b16 %v396, %v392
    %v629 = vpack.c.b16 %v397, %v393
    %v630 = vpack.c.b16 %v398, %v394
    %v631 = vpack.c.b16 %v403, %v399
    %v632 = vpack.c.b16 %v404, %v400
    %v633 = vpack.c.b16 %v405, %v401
    %v634 = vpack.c.b16 %v406, %v402
    %v635 = vpack.c.b16 %v411, %v407
    %v636 = vpack.c.b16 %v412, %v408
    %v637 = vpack.c.b16 %v413, %v409
    %v638 = vpack.c.b16 %v414, %v410
    %v639 = vpack.c.b16 %v419, %v415
    %v640 = vpack.c.b16 %v420, %v416
    %v641 = vpack.c.b16 %v421, %v417
    %v642 = vpack.c.b16 %v422, %v418
    %v643 = vpack.c.b16 %v427, %v423
    %v644 = vpack.c.b16 %v428, %v424
    %v645 = vpack.c.b16 %v429, %v425
    %v646 = vpack.c.b16 %v430, %v426
    %v647 = vpack.c.b16 %v435, %v431
    %v648 = vpack.c.b16 %v436, %v432
    %v649 = vpack.c.b16 %v437, %v433
    %v650 = vpack.c.b16 %v438, %v434
    %v651 = vpack.c.b16 %v443, %v439
    %v652 = vpack.c.b16 %v444, %v440
    %v653 = vpack.c.b16 %v445, %v441
    %v654 = vpack.c.b16 %v446, %v442
    %v655 = vpack.c.b16 %v451, %v447
    %v656 = vpack.c.b16 %v452, %v448
    %v657 = vpack.c.b16 %v453, %v449
    %v658 = vpack.c.b16 %v454, %v450
    %v659 = vpack.c.b16 %v459, %v455
    %v660 = vpack.c.b16 %v460, %v456
    %v661 = vpack.c.b16 %v461, %v457
    %v662 = vpack.c.b16 %v462, %v458
    %v663 = vpack.c.b16 %v467, %v463
    %v664 = vpack.c.b16 %v468, %v464
    %v665 = vpack.c.b16 %v469, %v465
    %v666 = vpack.c.b16 %v470, %v466
    %v667 = vpack.c.b16 %v475, %v471
    %v668 = vpack.c.b16 %v476, %v472
    %v669 = vpack.c.b16 %v477, %v473
    %v670 = vpack.c.b16 %v478, %v474
    %v671 = vpack.c.b16 %v483, %v479
    %v672 = vpack.c.b16 %v484, %v480
    %v673 = vpack.c.b16 %v485, %v481
    %v674 = vpack.c.b16 %v486, %v482
    %v675 = vpack.c.b16 %v491, %v487
    %v676 = vpack.c.b16 %v492, %v488
    %v677 = vpack.c.b16 %v493, %v489
    %v678 = vpack.c.b16 %v494, %v490
    %v679 = vpack.c.b16 %v499, %v495
    %v680 = vpack.c.b16 %v500, %v496
    %v681 = vpack.c.b16 %v501, %v497
    %v682 = vpack.c.b16 %v502, %v498
    %v683 = vpack.c.b16 %v507, %v503
    %v684 = vpack.c.b16 %v508, %v504
    %v685 = vpack.c.b16 %v509, %v505
    %v686 = vpack.c.b16 %v510, %v506
    %v687 = vpack.c.b16 %v515, %v511
    %v688 = vpack.c.b16 %v516, %v512
    %v689 = vpack.c.b16 %v517, %v513
    %v690 = vpack.c.b16 %v518, %v514
    %v691 = vpack.c.b16 %v523, %v519
    %v692 = vpack.c.b16 %v524, %v520
    %v693 = vpack.c.b16 %v525, %v521
    %v694 = vpack.c.b16 %v526, %v522
    %v695 = vpack.c.b16 %v531, %v527
    %v696 = vpack.c.b16 %v532, %v528
    %v697 = vpack.c.b16 %v533, %v529
    %v698 = vpack.c.b16 %v534, %v530
    %v699 = vpack.c.b16 %v539, %v535
    %v700 = vpack.c.b16 %v540, %v536
    %v701 = vpack.c.b16 %v541, %v537
    %v702 = vpack.c.b16 %v542, %v538
    %v703 = vpack.c.b16 %v547, %v543
    %v704 = vpack.c.b16 %v548, %v544
    %v705 = vpack.c.b16 %v549, %v545
    %v706 = vpack.c.b16 %v550, %v546
    %v707 = vpack.c.b16 %v555, %v551
    %v708 = vpack.c.b16 %v556, %v552
    %v709 = vpack.c.b16 %v557, %v553
    %v710 = vpack.c.b16 %v558, %v554
    %v711 = vpack.c.b16 %v563, %v559
    %v712 = vpack.c.b16 %v564, %v560
    %v713 = vpack.c.b16 %v565, %v561
    %v714 = vpack.c.b16 %v566, %v562
    %v715 = vpack.c.b16 %v571, %v567
    %v716 = vpack.c.b16 %v572, %v568
    %v717 = vpack.c.b16 %v573, %v569
    %v718 = vpack.c.b16 %v574, %v570
    %v719 = vpack.c.b16 %v579, %v575
    %v720 = vpack.c.b16 %v580, %v576
    %v721 = vpack.c.b16 %v581, %v577
    %v722 = vpack.c.b16 %v582, %v578
    %v723 = vpack.c.b16 %v587, %v583
    %v724 = vpack.c.b16 %v588, %v584
    %v725 = vpack.c.b16 %v589, %v585
    %v726 = vpack.c.b16 %v590, %v586
    %v727 = vpack.c.b16 %v595, %v591
    %v728 = vpack.c.b16 %v596, %v592
    %v729 = vpack.c.b16 %v597, %v593
    %v730 = vpack.c.b16 %v598, %v594
    %v731 = vpack.c.b16 %v603, %v599
    %v732 = vpack.c.b16 %v604, %v600
    %v733 = vpack.c.b16 %v605, %v601
    %v734 = vpack.c.b16 %v606, %v602
    %v864 = vperm.slane %v222, 0
    %v865 = vperm.slane %v222, 1
    %v866 = vperm.slane %v222, 2
    %v867 = vperm.slane %v222, 3
    %872 = vmatpush.bf16.msra.mxu0 %v635
    %873 = vmatpush.bf16.msra.mxu0 %v631
    %874 = vmatpush.bf16.msra.mxu0 %v627
    %875 = vmatpush.bf16.msra.mxu0 %v623
    %876 = vmatpush.bf16.msra.mxu0 %v619
    %877 = vmatpush.bf16.msra.mxu0 %v615
    %878 = vmatpush.bf16.msra.mxu0 %v611
    %879 = vmatpush.bf16.msra.mxu0 %v607
    %880 = vmatmul.bf16.gmra.mxu0 %v90
    %v881 = vpop.f32.mrf.mxu0
    %v882 = vadd.f32 %v864, %v881
    %v883 = vpop.f32.mrf.mxu0
    %884 = vdwg.mxu0
    %885 = vmatpush.bf16.msra.mxu0 %v667
    %886 = vmatpush.bf16.msra.mxu0 %v663
    %887 = vmatpush.bf16.msra.mxu0 %v659
    %888 = vmatpush.bf16.msra.mxu0 %v655
    %889 = vmatpush.bf16.msra.mxu0 %v651
    %890 = vmatpush.bf16.msra.mxu0 %v647
    %891 = vmatpush.bf16.msra.mxu0 %v643
    %892 = vmatpush.bf16.msra.mxu0 %v639
    %893 = vmatmul.bf16.gmra.mxu0 %v91
    %v894 = vpop.f32.mrf.mxu0
    %v895 = vadd.f32 %v882, %v894
    %v896 = vpop.f32.mrf.mxu0
    %897 = vdwg.mxu0
    %898 = vmatpush.bf16.msra.mxu0 %v699
    %899 = vmatpush.bf16.msra.mxu0 %v695
    %900 = vmatpush.bf16.msra.mxu0 %v691
    %901 = vmatpush.bf16.msra.mxu0 %v687
    %902 = vmatpush.bf16.msra.mxu0 %v683
    %903 = vmatpush.bf16.msra.mxu0 %v679
    %904 = vmatpush.bf16.msra.mxu0 %v675
    %905 = vmatpush.bf16.msra.mxu0 %v671
    %906 = vmatmul.bf16.gmra.mxu0 %v92
    %v907 = vpop.f32.mrf.mxu0
    %v908 = vadd.f32 %v895, %v907
    %v909 = vpop.f32.mrf.mxu0
    %910 = vdwg.mxu0
    %911 = vmatpush.bf16.msra.mxu0 %v731
    %912 = vmatpush.bf16.msra.mxu0 %v727
    %913 = vmatpush.bf16.msra.mxu0 %v723
    %914 = vmatpush.bf16.msra.mxu0 %v719
    %915 = vmatpush.bf16.msra.mxu0 %v715
    %916 = vmatpush.bf16.msra.mxu0 %v711
    %917 = vmatpush.bf16.msra.mxu0 %v707
    %918 = vmatpush.bf16.msra.mxu0 %v703
    %919 = vmatmul.bf16.gmra.mxu0 %v93
    %v920 = vpop.f32.mrf.mxu0
    %v921 = vadd.f32 %v908, %v920
    %v922 = vpop.f32.mrf.mxu0
    %923 = vdwg.mxu0
    %924 = vmatpush.bf16.msra.mxu0 %v636
    %925 = vmatpush.bf16.msra.mxu0 %v632
    %926 = vmatpush.bf16.msra.mxu0 %v628
    %927 = vmatpush.bf16.msra.mxu0 %v624
    %928 = vmatpush.bf16.msra.mxu0 %v620
    %929 = vmatpush.bf16.msra.mxu0 %v616
    %930 = vmatpush.bf16.msra.mxu0 %v612
    %931 = vmatpush.bf16.msra.mxu0 %v608
    %932 = vmatmul.bf16.gmra.mxu0 %v90
    %v933 = vpop.f32.mrf.mxu0
    %v934 = vadd.f32 %v865, %v933
    %v935 = vpop.f32.mrf.mxu0
    %936 = vdwg.mxu0
    %937 = vmatpush.bf16.msra.mxu0 %v668
    %938 = vmatpush.bf16.msra.mxu0 %v664
    %939 = vmatpush.bf16.msra.mxu0 %v660
    %940 = vmatpush.bf16.msra.mxu0 %v656
    %941 = vmatpush.bf16.msra.mxu0 %v652
    %942 = vmatpush.bf16.msra.mxu0 %v648
    %943 = vmatpush.bf16.msra.mxu0 %v644
    %944 = vmatpush.bf16.msra.mxu0 %v640
    %945 = vmatmul.bf16.gmra.mxu0 %v91
    %v946 = vpop.f32.mrf.mxu0
    %v947 = vadd.f32 %v934, %v946
    %v948 = vpop.f32.mrf.mxu0
    %949 = vdwg.mxu0
    %950 = vmatpush.bf16.msra.mxu0 %v700
    %951 = vmatpush.bf16.msra.mxu0 %v696
    %952 = vmatpush.bf16.msra.mxu0 %v692
    %953 = vmatpush.bf16.msra.mxu0 %v688
    %954 = vmatpush.bf16.msra.mxu0 %v684
    %955 = vmatpush.bf16.msra.mxu0 %v680
    %956 = vmatpush.bf16.msra.mxu0 %v676
    %957 = vmatpush.bf16.msra.mxu0 %v672
    %958 = vmatmul.bf16.gmra.mxu0 %v92
    %v959 = vpop.f32.mrf.mxu0
    %v960 = vadd.f32 %v947, %v959
    %v961 = vpop.f32.mrf.mxu0
    %962 = vdwg.mxu0
    %963 = vmatpush.bf16.msra.mxu0 %v732
    %964 = vmatpush.bf16.msra.mxu0 %v728
    %965 = vmatpush.bf16.msra.mxu0 %v724
    %966 = vmatpush.bf16.msra.mxu0 %v720
    %967 = vmatpush.bf16.msra.mxu0 %v716
    %968 = vmatpush.bf16.msra.mxu0 %v712
    %969 = vmatpush.bf16.msra.mxu0 %v708
    %970 = vmatpush.bf16.msra.mxu0 %v704
    %971 = vmatmul.bf16.gmra.mxu0 %v93
    %v972 = vpop.f32.mrf.mxu0
    %v973 = vadd.f32 %v960, %v972
    %v974 = vpop.f32.mrf.mxu0
    %975 = vdwg.mxu0
    %976 = vmatpush.bf16.msra.mxu0 %v637
    %977 = vmatpush.bf16.msra.mxu0 %v633
    %978 = vmatpush.bf16.msra.mxu0 %v629
    %979 = vmatpush.bf16.msra.mxu0 %v625
    %980 = vmatpush.bf16.msra.mxu0 %v621
    %981 = vmatpush.bf16.msra.mxu0 %v617
    %982 = vmatpush.bf16.msra.mxu0 %v613
    %983 = vmatpush.bf16.msra.mxu0 %v609
    %984 = vmatmul.bf16.gmra.mxu0 %v90
    %v985 = vpop.f32.mrf.mxu0
    %v986 = vadd.f32 %v866, %v985
    %v987 = vpop.f32.mrf.mxu0
    %988 = vdwg.mxu0
    %989 = vmatpush.bf16.msra.mxu0 %v669
    %990 = vmatpush.bf16.msra.mxu0 %v665
    %991 = vmatpush.bf16.msra.mxu0 %v661
    %992 = vmatpush.bf16.msra.mxu0 %v657
    %993 = vmatpush.bf16.msra.mxu0 %v653
    %994 = vmatpush.bf16.msra.mxu0 %v649
    %995 = vmatpush.bf16.msra.mxu0 %v645
    %996 = vmatpush.bf16.msra.mxu0 %v641
    %997 = vmatmul.bf16.gmra.mxu0 %v91
    %v998 = vpop.f32.mrf.mxu0
    %v999 = vadd.f32 %v986, %v998
    %v1000 = vpop.f32.mrf.mxu0
    %1001 = vdwg.mxu0
    %1002 = vmatpush.bf16.msra.mxu0 %v701
    %1003 = vmatpush.bf16.msra.mxu0 %v697
    %1004 = vmatpush.bf16.msra.mxu0 %v693
    %1005 = vmatpush.bf16.msra.mxu0 %v689
    %1006 = vmatpush.bf16.msra.mxu0 %v685
    %1007 = vmatpush.bf16.msra.mxu0 %v681
    %1008 = vmatpush.bf16.msra.mxu0 %v677
    %1009 = vmatpush.bf16.msra.mxu0 %v673
    %1010 = vmatmul.bf16.gmra.mxu0 %v92
    %v1011 = vpop.f32.mrf.mxu0
    %v1012 = vadd.f32 %v999, %v1011
    %v1013 = vpop.f32.mrf.mxu0
    %1014 = vdwg.mxu0
    %1015 = vmatpush.bf16.msra.mxu0 %v733
    %1016 = vmatpush.bf16.msra.mxu0 %v729
    %1017 = vmatpush.bf16.msra.mxu0 %v725
    %1018 = vmatpush.bf16.msra.mxu0 %v721
    %1019 = vmatpush.bf16.msra.mxu0 %v717
    %1020 = vmatpush.bf16.msra.mxu0 %v713
    %1021 = vmatpush.bf16.msra.mxu0 %v709
    %1022 = vmatpush.bf16.msra.mxu0 %v705
    %1023 = vmatmul.bf16.gmra.mxu0 %v93
    %v1024 = vpop.f32.mrf.mxu0
    %v1025 = vadd.f32 %v1012, %v1024
    %v1026 = vpop.f32.mrf.mxu0
    %1027 = vdwg.mxu0
    %1028 = vmatpush.bf16.msra.mxu0 %v638
    %1029 = vmatpush.bf16.msra.mxu0 %v634
    %1030 = vmatpush.bf16.msra.mxu0 %v630
    %1031 = vmatpush.bf16.msra.mxu0 %v626
    %1032 = vmatpush.bf16.msra.mxu0 %v622
    %1033 = vmatpush.bf16.msra.mxu0 %v618
    %1034 = vmatpush.bf16.msra.mxu0 %v614
    %1035 = vmatpush.bf16.msra.mxu0 %v610
    %1036 = vmatmul.bf16.gmra.mxu0 %v90
    %v1037 = vpop.f32.mrf.mxu0
    %v1038 = vadd.f32 %v867, %v1037
    %v1039 = vpop.f32.mrf.mxu0
    %1040 = vdwg.mxu0
    %1041 = vmatpush.bf16.msra.mxu0 %v670
    %1042 = vmatpush.bf16.msra.mxu0 %v666
    %1043 = vmatpush.bf16.msra.mxu0 %v662
    %1044 = vmatpush.bf16.msra.mxu0 %v658
    %1045 = vmatpush.bf16.msra.mxu0 %v654
    %1046 = vmatpush.bf16.msra.mxu0 %v650
    %1047 = vmatpush.bf16.msra.mxu0 %v646
    %1048 = vmatpush.bf16.msra.mxu0 %v642
    %1049 = vmatmul.bf16.gmra.mxu0 %v91
    %v1050 = vpop.f32.mrf.mxu0
    %v1051 = vadd.f32 %v1038, %v1050
    %v1052 = vpop.f32.mrf.mxu0
    %1053 = vdwg.mxu0
    %1054 = vmatpush.bf16.msra.mxu0 %v702
    %1055 = vmatpush.bf16.msra.mxu0 %v698
    %1056 = vmatpush.bf16.msra.mxu0 %v694
    %1057 = vmatpush.bf16.msra.mxu0 %v690
    %1058 = vmatpush.bf16.msra.mxu0 %v686
    %1059 = vmatpush.bf16.msra.mxu0 %v682
    %1060 = vmatpush.bf16.msra.mxu0 %v678
    %1061 = vmatpush.bf16.msra.mxu0 %v674
    %1062 = vmatmul.bf16.gmra.mxu0 %v92
    %v1063 = vpop.f32.mrf.mxu0
    %v1064 = vadd.f32 %v1051, %v1063
    %v1065 = vpop.f32.mrf.mxu0
    %1066 = vdwg.mxu0
    %1067 = vmatpush.bf16.msra.mxu0 %v734
    %1068 = vmatpush.bf16.msra.mxu0 %v730
    %1069 = vmatpush.bf16.msra.mxu0 %v726
    %1070 = vmatpush.bf16.msra.mxu0 %v722
    %1071 = vmatpush.bf16.msra.mxu0 %v718
    %1072 = vmatpush.bf16.msra.mxu0 %v714
    %1073 = vmatpush.bf16.msra.mxu0 %v710
    %1074 = vmatpush.bf16.msra.mxu0 %v706
    %1075 = vmatmul.bf16.gmra.mxu0 %v93
    %v1076 = vpop.f32.mrf.mxu0
    %v1077 = vadd.f32 %v1064, %v1076
    %v1078 = vpop.f32.mrf.mxu0
    %1079 = vdwg.mxu0
    %v1080 = vmul.f32 %v921, 0.2
    %v1081 = vmul.f32 %v973, 0.2
    %v1082 = vmul.f32 %v1025, 0.2
    %v1083 = vmul.f32 %v1077, 0.2
    %v1084 = vmax.f32 %v921, %v1080
    %v1085 = vmax.f32 %v973, %v1081
    %v1086 = vmax.f32 %v1025, %v1082
    %v1087 = vmax.f32 %v1077, %v1083
    %v1088 = vpack.c.bf16 %v1084, %v1084
    %v1089 = vpack.c.bf16 %v1085, %v1085
    %v1090 = vpack.c.bf16 %v1086, %v1086
    %v1091 = vpack.c.bf16 %v1087, %v1087
    %v1092 = vld [vmem:[#allocation8] sm:$0xf]
    %v1093 = vld [vmem:[#allocation8 + $0x4] sm:$0xf]
    %v1094 = vld [vmem:[#allocation8 + $0x8] sm:$0xf]
    %v1095 = vld [vmem:[#allocation8 + $0xc] sm:$0xf]
    %v1096 = vld [vmem:[#allocation8 + $0x10] sm:$0xf]
    %v1097 = vld [vmem:[#allocation8 + $0x14] sm:$0xf]
    %v1098 = vld [vmem:[#allocation8 + $0x18] sm:$0xf]
    %v1099 = vld [vmem:[#allocation8 + $0x1c] sm:$0xf]
    %v1100 = vld [vmem:[#allocation8 + $0x20] sm:$0xf]
    %v1101 = vld [vmem:[#allocation8 + $0x24] sm:$0xf]
    %v1102 = vld [vmem:[#allocation8 + $0x28] sm:$0xf]
    %v1103 = vld [vmem:[#allocation8 + $0x2c] sm:$0xf]
    %v1104 = vld [vmem:[#allocation8 + $0x30] sm:$0xf]
    %v1105 = vld [vmem:[#allocation8 + $0x34] sm:$0xf]
    %v1106 = vld [vmem:[#allocation8 + $0x38] sm:$0xf]
    %v1107 = vld [vmem:[#allocation8 + $0x3c] sm:$0xf]
    %v1108 = vld [vmem:[#allocation8 + $0x40] sm:$0xf]
    %v1109 = vld [vmem:[#allocation8 + $0x44] sm:$0xf]
    %v1110 = vld [vmem:[#allocation8 + $0x48] sm:$0xf]
    %v1111 = vld [vmem:[#allocation8 + $0x4c] sm:$0xf]
    %v1112 = vld [vmem:[#allocation8 + $0x50] sm:$0xf]
    %v1113 = vld [vmem:[#allocation8 + $0x54] sm:$0xf]
    %v1114 = vld [vmem:[#allocation8 + $0x58] sm:$0xf]
    %v1115 = vld [vmem:[#allocation8 + $0x5c] sm:$0xf]
    %v1116 = vld [vmem:[#allocation8 + $0x60] sm:$0xf]
    %v1117 = vld [vmem:[#allocation8 + $0x64] sm:$0xf]
    %v1118 = vld [vmem:[#allocation8 + $0x68] sm:$0xf]
    %v1119 = vld [vmem:[#allocation8 + $0x6c] sm:$0xf]
    %v1120 = vld [vmem:[#allocation8 + $0x70] sm:$0xf]
    %v1121 = vld [vmem:[#allocation8 + $0x74] sm:$0xf]
    %v1122 = vld [vmem:[#allocation8 + $0x78] sm:$0xf]
    %v1123 = vld [vmem:[#allocation8 + $0x7c] sm:$0xf]
    %v1124 = vld [vmem:[#allocation8 + $0x80] sm:$0xf]
    %v1125 = vld [vmem:[#allocation8 + $0x84] sm:$0xf]
    %v1126 = vld [vmem:[#allocation8 + $0x88] sm:$0xf]
    %v1127 = vld [vmem:[#allocation8 + $0x8c] sm:$0xf]
    %v1128 = vld [vmem:[#allocation8 + $0x90] sm:$0xf]
    %v1129 = vld [vmem:[#allocation8 + $0x94] sm:$0xf]
    %v1130 = vld [vmem:[#allocation8 + $0x98] sm:$0xf]
    %v1131 = vld [vmem:[#allocation8 + $0x9c] sm:$0xf]
    %v1132 = vld [vmem:[#allocation8 + $0xa0] sm:$0xf]
    %v1133 = vld [vmem:[#allocation8 + $0xa4] sm:$0xf]
    %v1134 = vld [vmem:[#allocation8 + $0xa8] sm:$0xf]
    %v1135 = vld [vmem:[#allocation8 + $0xac] sm:$0xf]
    %v1136 = vld [vmem:[#allocation8 + $0xb0] sm:$0xf]
    %v1137 = vld [vmem:[#allocation8 + $0xb4] sm:$0xf]
    %v1138 = vld [vmem:[#allocation8 + $0xb8] sm:$0xf]
    %v1139 = vld [vmem:[#allocation8 + $0xbc] sm:$0xf]
    %v1140 = vld [vmem:[#allocation8 + $0xc0] sm:$0xf]
    %v1141 = vld [vmem:[#allocation8 + $0xc4] sm:$0xf]
    %v1142 = vld [vmem:[#allocation8 + $0xc8] sm:$0xf]
    %v1143 = vld [vmem:[#allocation8 + $0xcc] sm:$0xf]
    %v1144 = vld [vmem:[#allocation8 + $0xd0] sm:$0xf]
    %v1145 = vld [vmem:[#allocation8 + $0xd4] sm:$0xf]
    %v1146 = vld [vmem:[#allocation8 + $0xd8] sm:$0xf]
    %v1147 = vld [vmem:[#allocation8 + $0xdc] sm:$0xf]
    %v1148 = vld [vmem:[#allocation8 + $0xe0] sm:$0xf]
    %v1149 = vld [vmem:[#allocation8 + $0xe4] sm:$0xf]
    %v1150 = vld [vmem:[#allocation8 + $0xe8] sm:$0xf]
    %v1151 = vld [vmem:[#allocation8 + $0xec] sm:$0xf]
    %v1152 = vld [vmem:[#allocation8 + $0xf0] sm:$0xf]
    %v1153 = vld [vmem:[#allocation8 + $0xf4] sm:$0xf]
    %v1154 = vld [vmem:[#allocation8 + $0xf8] sm:$0xf]
    %v1155 = vld [vmem:[#allocation8 + $0xfc] sm:$0xf]
    %v1156 = vld [vmem:[%s4] sm:$0x1]
    %v1221 = vunpack.c.l.b16 %v1092
    %v1222 = vunpack.c.l.b16 %v1093
    %v1223 = vunpack.c.l.b16 %v1094
    %v1224 = vunpack.c.l.b16 %v1095
    %v1225 = vunpack.c.l.b16 %v1096
    %v1226 = vunpack.c.l.b16 %v1097
    %v1227 = vunpack.c.l.b16 %v1098
    %v1228 = vunpack.c.l.b16 %v1099
    %v1229 = vunpack.c.l.b16 %v1100
    %v1230 = vunpack.c.l.b16 %v1101
    %v1231 = vunpack.c.l.b16 %v1102
    %v1232 = vunpack.c.l.b16 %v1103
    %v1233 = vunpack.c.l.b16 %v1104
    %v1234 = vunpack.c.l.b16 %v1105
    %v1235 = vunpack.c.l.b16 %v1106
    %v1236 = vunpack.c.l.b16 %v1107
    %v1237 = vunpack.c.l.b16 %v1108
    %v1238 = vunpack.c.l.b16 %v1109
    %v1239 = vunpack.c.l.b16 %v1110
    %v1240 = vunpack.c.l.b16 %v1111
    %v1241 = vunpack.c.l.b16 %v1112
    %v1242 = vunpack.c.l.b16 %v1113
    %v1243 = vunpack.c.l.b16 %v1114
    %v1244 = vunpack.c.l.b16 %v1115
    %v1245 = vunpack.c.l.b16 %v1116
    %v1246 = vunpack.c.l.b16 %v1117
    %v1247 = vunpack.c.l.b16 %v1118
    %v1248 = vunpack.c.l.b16 %v1119
    %v1249 = vunpack.c.l.b16 %v1120
    %v1250 = vunpack.c.l.b16 %v1121
    %v1251 = vunpack.c.l.b16 %v1122
    %v1252 = vunpack.c.l.b16 %v1123
    %v1253 = vunpack.c.l.b16 %v1124
    %v1254 = vunpack.c.l.b16 %v1125
    %v1255 = vunpack.c.l.b16 %v1126
    %v1256 = vunpack.c.l.b16 %v1127
    %v1257 = vunpack.c.l.b16 %v1128
    %v1258 = vunpack.c.l.b16 %v1129
    %v1259 = vunpack.c.l.b16 %v1130
    %v1260 = vunpack.c.l.b16 %v1131
    %v1261 = vunpack.c.l.b16 %v1132
    %v1262 = vunpack.c.l.b16 %v1133
    %v1263 = vunpack.c.l.b16 %v1134
    %v1264 = vunpack.c.l.b16 %v1135
    %v1265 = vunpack.c.l.b16 %v1136
    %v1266 = vunpack.c.l.b16 %v1137
    %v1267 = vunpack.c.l.b16 %v1138
    %v1268 = vunpack.c.l.b16 %v1139
    %v1269 = vunpack.c.l.b16 %v1140
    %v1270 = vunpack.c.l.b16 %v1141
    %v1271 = vunpack.c.l.b16 %v1142
    %v1272 = vunpack.c.l.b16 %v1143
    %v1273 = vunpack.c.l.b16 %v1144
    %v1274 = vunpack.c.l.b16 %v1145
    %v1275 = vunpack.c.l.b16 %v1146
    %v1276 = vunpack.c.l.b16 %v1147
    %v1277 = vunpack.c.l.b16 %v1148
    %v1278 = vunpack.c.l.b16 %v1149
    %v1279 = vunpack.c.l.b16 %v1150
    %v1280 = vunpack.c.l.b16 %v1151
    %v1281 = vunpack.c.l.b16 %v1152
    %v1282 = vunpack.c.l.b16 %v1153
    %v1283 = vunpack.c.l.b16 %v1154
    %v1284 = vunpack.c.l.b16 %v1155
    %v1285 = vpack.c.b16 %v1222, %v1221
    %v1286 = vpack.c.b16 %v1224, %v1223
    %v1287 = vpack.c.b16 %v1226, %v1225
    %v1288 = vpack.c.b16 %v1228, %v1227
    %v1289 = vpack.c.b16 %v1230, %v1229
    %v1290 = vpack.c.b16 %v1232, %v1231
    %v1291 = vpack.c.b16 %v1234, %v1233
    %v1292 = vpack.c.b16 %v1236, %v1235
    %v1293 = vpack.c.b16 %v1238, %v1237
    %v1294 = vpack.c.b16 %v1240, %v1239
    %v1295 = vpack.c.b16 %v1242, %v1241
    %v1296 = vpack.c.b16 %v1244, %v1243
    %v1297 = vpack.c.b16 %v1246, %v1245
    %v1298 = vpack.c.b16 %v1248, %v1247
    %v1299 = vpack.c.b16 %v1250, %v1249
    %v1300 = vpack.c.b16 %v1252, %v1251
    %v1301 = vpack.c.b16 %v1254, %v1253
    %v1302 = vpack.c.b16 %v1256, %v1255
    %v1303 = vpack.c.b16 %v1258, %v1257
    %v1304 = vpack.c.b16 %v1260, %v1259
    %v1305 = vpack.c.b16 %v1262, %v1261
    %v1306 = vpack.c.b16 %v1264, %v1263
    %v1307 = vpack.c.b16 %v1266, %v1265
    %v1308 = vpack.c.b16 %v1268, %v1267
    %v1309 = vpack.c.b16 %v1270, %v1269
    %v1310 = vpack.c.b16 %v1272, %v1271
    %v1311 = vpack.c.b16 %v1274, %v1273
    %v1312 = vpack.c.b16 %v1276, %v1275
    %v1313 = vpack.c.b16 %v1278, %v1277
    %v1314 = vpack.c.b16 %v1280, %v1279
    %v1315 = vpack.c.b16 %v1282, %v1281
    %v1316 = vpack.c.b16 %v1284, %v1283
    %1349 = vmatpush.bf16.msra.mxu0 %v1292
    %1350 = vmatpush.bf16.msra.mxu0 %v1291
    %1351 = vmatpush.bf16.msra.mxu0 %v1290
    %1352 = vmatpush.bf16.msra.mxu0 %v1289
    %1353 = vmatpush.bf16.msra.mxu0 %v1288
    %1354 = vmatpush.bf16.msra.mxu0 %v1287
    %1355 = vmatpush.bf16.msra.mxu0 %v1286
    %1356 = vmatpush.bf16.msra.mxu0 %v1285
    %1357 = vmatmul.bf16.gmra.mxu0 %v1088
    %v1358 = vpop.f32.mrf.mxu0
    %v1359 = vadd.f32 %v1156, %v1358
    %v1360 = vpop.f32.mrf.mxu0
    %1361 = vdwg.mxu0
    %1362 = vmatpush.bf16.msra.mxu0 %v1300
    %1363 = vmatpush.bf16.msra.mxu0 %v1299
    %1364 = vmatpush.bf16.msra.mxu0 %v1298
    %1365 = vmatpush.bf16.msra.mxu0 %v1297
    %1366 = vmatpush.bf16.msra.mxu0 %v1296
    %1367 = vmatpush.bf16.msra.mxu0 %v1295
    %1368 = vmatpush.bf16.msra.mxu0 %v1294
    %1369 = vmatpush.bf16.msra.mxu0 %v1293
    %1370 = vmatmul.bf16.gmra.mxu0 %v1089
    %v1371 = vpop.f32.mrf.mxu0
    %v1372 = vadd.f32 %v1359, %v1371
    %v1373 = vpop.f32.mrf.mxu0
    %1374 = vdwg.mxu0
    %1375 = vmatpush.bf16.msra.mxu0 %v1308
    %1376 = vmatpush.bf16.msra.mxu0 %v1307
    %1377 = vmatpush.bf16.msra.mxu0 %v1306
    %1378 = vmatpush.bf16.msra.mxu0 %v1305
    %1379 = vmatpush.bf16.msra.mxu0 %v1304
    %1380 = vmatpush.bf16.msra.mxu0 %v1303
    %1381 = vmatpush.bf16.msra.mxu0 %v1302
    %1382 = vmatpush.bf16.msra.mxu0 %v1301
    %1383 = vmatmul.bf16.gmra.mxu0 %v1090
    %v1384 = vpop.f32.mrf.mxu0
    %v1385 = vadd.f32 %v1372, %v1384
    %v1386 = vpop.f32.mrf.mxu0
    %1387 = vdwg.mxu0
    %1388 = vmatpush.bf16.msra.mxu0 %v1316
    %1389 = vmatpush.bf16.msra.mxu0 %v1315
    %1390 = vmatpush.bf16.msra.mxu0 %v1314
    %1391 = vmatpush.bf16.msra.mxu0 %v1313
    %1392 = vmatpush.bf16.msra.mxu0 %v1312
    %1393 = vmatpush.bf16.msra.mxu0 %v1311
    %1394 = vmatpush.bf16.msra.mxu0 %v1310
    %1395 = vmatpush.bf16.msra.mxu0 %v1309
    %1396 = vmatmul.bf16.gmra.mxu0 %v1091
    %v1397 = vpop.f32.mrf.mxu0
    %v1398 = vadd.f32 %v1385, %v1397
    %v1399 = vpop.f32.mrf.mxu0
    %1400 = vdwg.mxu0
    %1401 = vst [vmem:[#allocation10] sm:$0x1] %v1398
    // Predicated region
    $region38: #{tpu_custom_call.1} parent=1 // pred_check
      _
    $region39: #{tpu_custom_call.1} parent=1 // pred_check_branch
      %1403 = sbr.rel (0) target = $region41
    $region40: #{tpu_custom_call.1} parent=1 // pred_region
      %1405 = vsyncadd [#allocation4], 0
      %s1407 = sshll.u32 [#allocation10], 4
      %s1408 = int_to_ptr.vmem [resolvable:$true] %s1407
      %s1409 = sshll.u32 %s5, 4
      %s1410 = int_to_ptr.hbm [resolvable:$true] %s1409
      %1412 = dma.vmem_to_hbm [thread:$0]  %s1408, 16, %s1410, [#allocation4]
    $region41: #{tpu_custom_call.1} parent=1 // pred_fallthru
      _
    // Predicated region
    $region42: #{tpu_custom_call.1} parent=1 // pred_check
      _
    $region43: #{tpu_custom_call.1} parent=1 // pred_check_branch
      %1414 = sbr.rel (0) target = $region45
    $region44: #{tpu_custom_call.1} parent=1 // pred_region
      %1416 = dma.done [#allocation4], 16
    $region45: #{tpu_custom_call.1} parent=1 // pred_fallthru
      _
    %1417 = vsyncpa [#allocation3], 1
    %1418 = vsyncpa [#allocation6], 1
    %1419 = vsyncpa [#allocation9], 1
    %1420 = vsyncpa [#allocation4], 1

</llo_original>
